<compile_context>
chip_gen: v6e
topology: v6e:2x2x1
jax: 0.10.0
libtpu: 0.0.40
codegen_flags: <defaults>
</compile_context>

<pallas_src>
import functools
import math

import jax
import jax.numpy as jnp
from jax.experimental import pallas as pl
from jax.experimental.pallas import tpu as pltpu

KERNEL_SET = (2, 3, 6, 7)
KMAX = max(KERNEL_SET)   # 7 taps after zero padding


# --------------------------------------------------------------------------- #
# Kernel body
# --------------------------------------------------------------------------- #
def _dilated_inception_kernel(x_ref, w_ref, b_ref, o_ref, a_ref, *,
                              dilation, t_out):
    """x_ref: (cin, n_tile, T) input dtype; w_ref: (cout, KMAX*cin) compute dtype;
    b_ref: (cout, 1) f32; o_ref: (cout, n_tile*t_out) out dtype;
    a_ref: (KMAX*cin, n_tile*t_out) compute-dtype VMEM scratch (im2col)."""
    cin, n_tile, _T = x_ref.shape

    # Build the im2col once: row j*cin + ci, column nl*t_out + t holds
    # x[ci, nl, t + j*dilation].  One cast + one store per element; no
    # concatenate, no full-tile cast temp.  (Static python loop -> unrolled.)
    for j in range(KMAX):
        win = x_ref[:, :, j * dilation: j * dilation + t_out]   # (cin, n_tile, t_out)
        a_ref[pl.ds(j * cin, cin), :] = (
            win.astype(a_ref.dtype).reshape(cin, n_tile * t_out))

    # Single MXU dot: (cout, 7*cin) @ (7*cin, n_tile*t_out) -> f32 accumulate.
    # W stays the LHS so the matmul / store lane axis is n_tile*t_out (>=128),
    # not cout (8..32) -> lane-dense, unmasked stores.
    acc = jnp.dot(w_ref[...], a_ref[...], preferred_element_type=jnp.float32)
    o_ref[...] = (acc + b_ref[...]).astype(o_ref.dtype)        # bias added in f32


# --------------------------------------------------------------------------- #
# Tiling / VMEM budgeting helpers
# --------------------------------------------------------------------------- #
def _round_up(x, m):
    return ((x + m - 1) // m) * m


def _default_vmem_budgets():
    """Generation-dispatched (budget, scoped-limit) in bytes."""
    try:
        cap = int(pltpu.get_tpu_info().vmem_capacity_bytes)
    except Exception:                       # pragma: no cover - conservative fallback
        cap = 128 * 1024 * 1024
    if cap <= 64 * 1024 * 1024:             # v7x-class: 64 MiB per TensorCore
        return 14 * 1024 * 1024, 32 * 1024 * 1024
    return 48 * 1024 * 1024, 96 * 1024 * 1024   # v5e / v6e: 128 MiB


def _choose_tiling(B, N, cin, cout, T, t_out, in_itemsize, out_itemsize,
                   comp_itemsize, budget_bytes):
    """Pick (N_pad, n_tile).

    n_tile is a multiple of `align` = lcm(8, 128/gcd(t_out,128)) so that the
    x block sublane dim is 8-aligned AND the flattened output block lane width
    n_tile*t_out is a multiple of 128 (unmasked vst, valid BlockSpec).
    N is padded up to a multiple of `align` so a divisor always exists.
    """
    lane_align = 128 // math.gcd(t_out, 128)
    align = (8 * lane_align) // math.gcd(8, lane_align)      # lcm(8, lane_align)
    N_pad = _round_up(N, align)
    cands = sorted({d for d in range(align, N_pad + 1, align) if N_pad % d == 0},
                   reverse=True)                              # descending

    def tile_bytes(sub, lane, itemsize):                      # layout-aware
        return _round_up(sub, 8) * _round_up(lane, 128) * itemsize

    def vmem_need(nt):
        x_blk = cin * tile_bytes(nt, T, in_itemsize)            # input block
        o_blk = tile_bytes(cout, nt * t_out, out_itemsize)      # output block
        a_scr = tile_bytes(KMAX * cin, nt * t_out, comp_itemsize)  # im2col scratch
        acc_f32 = tile_bytes(cout, nt * t_out, 4)               # f32 dot result
        win_tmp = cin * tile_bytes(nt, t_out, comp_itemsize)    # per-tap cast temp
        w_b = tile_bytes(cout, KMAX * cin, comp_itemsize) + tile_bytes(cout, 1, 4)
        return 2 * (x_blk + o_blk + w_b) + a_scr + acc_f32 + win_tmp   # 2x = dbl buf

    n_tile = None
    for nt in cands:
        if vmem_need(nt) <= budget_bytes:
            n_tile = nt
            break
    if n_tile is None:
        n_tile = cands[-1]          # smallest aligned tile; may still spill

    # Guarantee >=2 grid steps so dual-TensorCore chips (v7x) get parallel work.
    if B * (N_pad // n_tile) < 2:
        for nt in cands:
            if nt < n_tile and vmem_need(nt) <= budget_bytes:
                n_tile = nt
                break
    return N_pad, n_tile


# --------------------------------------------------------------------------- #
# Public wrapper
# --------------------------------------------------------------------------- #
def dilated_inception_pallas(x_nchw, weights, biases, dilation=2,
                             compute_dtype=jnp.bfloat16,
                             out_dtype=None,
                             vmem_budget_bytes=None,
                             vmem_limit_bytes=None):
    """x_nchw: (B, cin, N, T); weights[i]: (cout_per, cin, 1, k_i); biases[i]: (cout_per,).
    Returns (B, cout, N, T_out) exactly like the PyTorch module (NCHW in/out)."""
    B, cin, N, T = x_nchw.shape
    cp = weights[0].shape[0]
    cout = cp * len(KERNEL_SET)
    t_out = T - dilation * (KMAX - 1)
    assert t_out > 0, "time length too short for this dilation"
    out_dtype = x_nchw.dtype if out_dtype is None else out_dtype

    if vmem_budget_bytes is None or vmem_limit_bytes is None:
        d_budget, d_limit = _default_vmem_budgets()
        vmem_budget_bytes = d_budget if vmem_budget_bytes is None else vmem_budget_bytes
        vmem_limit_bytes = d_limit if vmem_limit_bytes is None else vmem_limit_bytes

    # ---- fold the 4 convs into one zero-padded 7-tap weight stack (plain JAX) --
    # tap j of conv with kernel k sits at global tap (KMAX - k) + j so every
    # conv reads the same input offsets t + j*dilation.
    w_full = jnp.zeros((KMAX, cin, cout), jnp.float32)
    for i, k in enumerate(KERNEL_SET):
        wt = jnp.transpose(weights[i][:, :, 0, :], (2, 1, 0)).astype(jnp.float32)  # (k, cin, cp)
        w_full = w_full.at[KMAX - k:KMAX, :, i * cp:(i + 1) * cp].set(wt)
    # (cout, KMAX*cin); column index = j*cin + ci, matching the im2col rows.
    w_flat = jnp.transpose(w_full, (2, 0, 1)).reshape(cout, KMAX * cin)
    w_flat = w_flat.astype(compute_dtype)
    b_full = jnp.concatenate(biases).astype(jnp.float32).reshape(cout, 1)

    N_pad, n_tile = _choose_tiling(
        B, N, cin, cout, T, t_out,
        jnp.dtype(x_nchw.dtype).itemsize,
        jnp.dtype(out_dtype).itemsize,
        jnp.dtype(compute_dtype).itemsize,
        vmem_budget_bytes)
    if N_pad != N:
        x_nchw = jnp.pad(x_nchw, ((0, 0), (0, 0), (0, N_pad - N), (0, 0)))

    kernel = functools.partial(_dilated_inception_kernel,
                               dilation=dilation, t_out=t_out)

    # TODO(synk): for very long T add a third grid axis over t_out chunks
    # (multiples of 128) with a KMAX*dilation input halo instead of shrinking
    # n_tile; bounds VMEM independently of T and removes T->next-128 lane padding.
    out_flat = pl.pallas_call(
        kernel,
        out_shape=jax.ShapeDtypeStruct((B, cout, N_pad * t_out), out_dtype),
        grid_spec=pltpu.PrefetchScalarGridSpec(
            num_scalar_prefetch=0,
            grid=(B, N_pad // n_tile),
            in_specs=[
                pl.BlockSpec((None, cin, n_tile, T), lambda b, n: (b, 0, n, 0)),
                pl.BlockSpec((cout, KMAX * cin), lambda b, n: (0, 0)),
                pl.BlockSpec((cout, 1), lambda b, n: (0, 0)),
            ],
            # Flattened, lane-dense output block: (cout, n_tile*t_out).
            out_specs=pl.BlockSpec((None, cout, n_tile * t_out),
                                   lambda b, n: (b, 0, n)),
            scratch_shapes=[pltpu.VMEM((KMAX * cin, n_tile * t_out),
                                       compute_dtype)],
        ),
        compiler_params=pltpu.CompilerParams(
            dimension_semantics=("parallel", "parallel"),
            vmem_limit_bytes=vmem_limit_bytes),
    )(x_nchw, w_flat, b_full)

    out = out_flat.reshape(B, cout, N_pad, t_out)   # free contiguous split
    if N_pad != N:
        out = out[:, :, :N, :]
    return out


# --------------------------------------------------------------------------- #
# Pure-JAX reference (matches the PyTorch forward exactly)
# --------------------------------------------------------------------------- #
def dilated_inception_reference(x_nchw, weights, biases, dilation=2):
    outs = []
    for i, k in enumerate(KERNEL_SET):
        o = jax.lax.conv_general_dilated(
            x_nchw, weights[i],
            window_strides=(1, 1), padding="VALID",
            rhs_dilation=(1, dilation),
            dimension_numbers=("NCHW", "OIHW", "NCHW"))
        outs.append(o + biases[i][None, :, None, None])
    t_out = outs[-1].shape[-1]
    outs = [o[..., -t_out:] for o in outs]
    return jnp.concatenate(outs, axis=1)


if __name__ == "__main__":
    # Small shapes: batch=2, cin=4, nodes=8, time=140 (-> t_out=128), cout=8, dilation=2
    B, CIN, NNODES, T = 2, 4, 8, 140
    COUT, DIL = 8, 2
    CP = COUT // len(KERNEL_SET)

    key = jax.random.PRNGKey(0)
    key, kx = jax.random.split(key)
    x = jax.random.normal(kx, (B, CIN, NNODES, T), dtype=jnp.float32)

    # deterministic parameter init (Conv2d weight shape: (cout_per, cin, 1, k))
    weights, biases = [], []
    for k in KERNEL_SET:
        key, kw, kb = jax.random.split(key, 3)
        weights.append(0.1 * jax.random.normal(kw, (CP, CIN, 1, k), jnp.float32))
        biases.append(0.1 * jax.random.normal(kb, (CP,), jnp.float32))

    ref = dilated_inception_reference(x, weights, biases, dilation=DIL)

    # 1) exactness of the fused 7-tap formulation (f32 MXU path, tight tol)
    out_f32 = dilated_inception_pallas(x, weights, biases, dilation=DIL,
                                       compute_dtype=jnp.float32)
    out_f32 = jax.block_until_ready(out_f32)
    assert out_f32.shape == ref.shape, (out_f32.shape, ref.shape)
    assert jnp.allclose(out_f32, ref, atol=1e-4, rtol=1e-4), \
        float(jnp.max(jnp.abs(out_f32 - ref)))

    # 2) default fast path: bf16 MXU operands, f32 accumulation (conv-level tol)
    out_bf16 = dilated_inception_pallas(x, weights, biases, dilation=DIL)
    out_bf16 = jax.block_until_ready(out_bf16)
    assert out_bf16.shape == ref.shape, (out_bf16.shape, ref.shape)
    assert jnp.allclose(out_bf16, ref, atol=3e-2, rtol=3e-2), \
        float(jnp.max(jnp.abs(out_bf16 - ref)))

    # 3) node count not a multiple of 8 -> exercises N padding + output trim
    key, kx2 = jax.random.split(key)
    x2 = jax.random.normal(kx2, (B, CIN, 10, T), dtype=jnp.float32)
    ref2 = dilated_inception_reference(x2, weights, biases, dilation=DIL)
    out2 = dilated_inception_pallas(x2, weights, biases, dilation=DIL,
                                    compute_dtype=jnp.float32)
    out2 = jax.block_until_ready(out2)
    assert out2.shape == ref2.shape, (out2.shape, ref2.shape)
    assert jnp.allclose(out2, ref2, atol=1e-4, rtol=1e-4), \
        float(jnp.max(jnp.abs(out2 - ref2)))

    print("KERNEL_OK")
</pallas_src>

<mosaic_0001>
module attributes {stable_mosaic.version = 11 : i64} {
  func.func @_dilated_inception_kernel(%arg0: i32, %arg1: i32, %arg2: memref<1x4x8x140xf32, #tpu.memory_space<vmem>>, %arg3: memref<8x28xf32, #tpu.memory_space<vmem>>, %arg4: memref<8x1xf32, #tpu.memory_space<vmem>>, %arg5: memref<1x8x1024xf32, #tpu.memory_space<vmem>>, %arg6: memref<28x1024xf32, #tpu.memory_space<vmem>>) attributes {dimension_semantics = [#tpu.dimension_semantics<parallel>, #tpu.dimension_semantics<parallel>], iteration_bounds = array<i64: 2, 1>, scalar_prefetch = 0 : i64, scratch_operands = 1 : i64, tpu.core_type = #tpu.core_type<tc>, window_params = [{transform_indices = @transform_0, window_bounds = array<i64: 1, 4, 8, 140>}, {pipeline_mode = #tpu.pipeline_mode<synchronous>, transform_indices = @transform_1, window_bounds = array<i64: 8, 28>}, {pipeline_mode = #tpu.pipeline_mode<synchronous>, transform_indices = @transform_2, window_bounds = array<i64: 8, 1>}, {transform_indices = @transform_3, window_bounds = array<i64: 1, 8, 1024>}]} {
    %c0 = arith.constant 0 : index
    %c0_0 = arith.constant 0 : index
    %c0_1 = arith.constant 0 : index
    %c0_2 = arith.constant 0 : index
    %0 = vector.load %arg2[%c0, %c0_0, %c0_1, %c0_2] : memref<1x4x8x140xf32, #tpu.memory_space<vmem>>, vector<1x4x8x128xf32>
    %1 = vector.shape_cast %0 : vector<1x4x8x128xf32> to vector<4x8x128xf32>
    %2 = vector.shape_cast %1 : vector<4x8x128xf32> to vector<4x1024xf32>
    %c0_3 = arith.constant 0 : index
    %c0_4 = arith.constant 0 : index
    %3 = vector.load %arg6[%c0_3, %c0_4] : memref<28x1024xf32, #tpu.memory_space<vmem>>, vector<4x1024xf32>
    tpu.vector_store %arg6[%c0_3, %c0_4], %2 {strides = array<i32>} : memref<28x1024xf32, #tpu.memory_space<vmem>>, vector<4x1024xf32>,
    %c0_5 = arith.constant 0 : index
    %c0_6 = arith.constant 0 : index
    %c0_7 = arith.constant 0 : index
    %c2 = arith.constant 2 : index
    %4 = vector.load %arg2[%c0_5, %c0_6, %c0_7, %c2] : memref<1x4x8x140xf32, #tpu.memory_space<vmem>>, vector<1x4x8x128xf32>
    %5 = vector.shape_cast %4 : vector<1x4x8x128xf32> to vector<4x8x128xf32>
    %6 = vector.shape_cast %5 : vector<4x8x128xf32> to vector<4x1024xf32>
    %c4 = arith.constant 4 : index
    %c0_8 = arith.constant 0 : index
    %7 = vector.load %arg6[%c4, %c0_8] : memref<28x1024xf32, #tpu.memory_space<vmem>>, vector<4x1024xf32>
    tpu.vector_store %arg6[%c4, %c0_8], %6 {strides = array<i32>} : memref<28x1024xf32, #tpu.memory_space<vmem>>, vector<4x1024xf32>,
    %c0_9 = arith.constant 0 : index
    %c0_10 = arith.constant 0 : index
    %c0_11 = arith.constant 0 : index
    %c4_12 = arith.constant 4 : index
    %8 = vector.load %arg2[%c0_9, %c0_10, %c0_11, %c4_12] : memref<1x4x8x140xf32, #tpu.memory_space<vmem>>, vector<1x4x8x128xf32>
    %9 = vector.shape_cast %8 : vector<1x4x8x128xf32> to vector<4x8x128xf32>
    %10 = vector.shape_cast %9 : vector<4x8x128xf32> to vector<4x1024xf32>
    %c8 = arith.constant 8 : index
    %c0_13 = arith.constant 0 : index
    %11 = vector.load %arg6[%c8, %c0_13] : memref<28x1024xf32, #tpu.memory_space<vmem>>, vector<4x1024xf32>
    tpu.vector_store %arg6[%c8, %c0_13], %10 {strides = array<i32>} : memref<28x1024xf32, #tpu.memory_space<vmem>>, vector<4x1024xf32>,
    %c0_14 = arith.constant 0 : index
    %c0_15 = arith.constant 0 : index
    %c0_16 = arith.constant 0 : index
    %c6 = arith.constant 6 : index
    %12 = vector.load %arg2[%c0_14, %c0_15, %c0_16, %c6] : memref<1x4x8x140xf32, #tpu.memory_space<vmem>>, vector<1x4x8x128xf32>
    %13 = vector.shape_cast %12 : vector<1x4x8x128xf32> to vector<4x8x128xf32>
    %14 = vector.shape_cast %13 : vector<4x8x128xf32> to vector<4x1024xf32>
    %c12 = arith.constant 12 : index
    %c0_17 = arith.constant 0 : index
    %15 = vector.load %arg6[%c12, %c0_17] : memref<28x1024xf32, #tpu.memory_space<vmem>>, vector<4x1024xf32>
    tpu.vector_store %arg6[%c12, %c0_17], %14 {strides = array<i32>} : memref<28x1024xf32, #tpu.memory_space<vmem>>, vector<4x1024xf32>,
    %c0_18 = arith.constant 0 : index
    %c0_19 = arith.constant 0 : index
    %c0_20 = arith.constant 0 : index
    %c8_21 = arith.constant 8 : index
    %16 = vector.load %arg2[%c0_18, %c0_19, %c0_20, %c8_21] : memref<1x4x8x140xf32, #tpu.memory_space<vmem>>, vector<1x4x8x128xf32>
    %17 = vector.shape_cast %16 : vector<1x4x8x128xf32> to vector<4x8x128xf32>
    %18 = vector.shape_cast %17 : vector<4x8x128xf32> to vector<4x1024xf32>
    %c16 = arith.constant 16 : index
    %c0_22 = arith.constant 0 : index
    %19 = vector.load %arg6[%c16, %c0_22] : memref<28x1024xf32, #tpu.memory_space<vmem>>, vector<4x1024xf32>
    tpu.vector_store %arg6[%c16, %c0_22], %18 {strides = array<i32>} : memref<28x1024xf32, #tpu.memory_space<vmem>>, vector<4x1024xf32>,
    %c0_23 = arith.constant 0 : index
    %c0_24 = arith.constant 0 : index
    %c0_25 = arith.constant 0 : index
    %c10 = arith.constant 10 : index
    %20 = vector.load %arg2[%c0_23, %c0_24, %c0_25, %c10] : memref<1x4x8x140xf32, #tpu.memory_space<vmem>>, vector<1x4x8x128xf32>
    %21 = vector.shape_cast %20 : vector<1x4x8x128xf32> to vector<4x8x128xf32>
    %22 = vector.shape_cast %21 : vector<4x8x128xf32> to vector<4x1024xf32>
    %c20 = arith.constant 20 : index
    %c0_26 = arith.constant 0 : index
    %23 = vector.load %arg6[%c20, %c0_26] : memref<28x1024xf32, #tpu.memory_space<vmem>>, vector<4x1024xf32>
    tpu.vector_store %arg6[%c20, %c0_26], %22 {strides = array<i32>} : memref<28x1024xf32, #tpu.memory_space<vmem>>, vector<4x1024xf32>,
    %c0_27 = arith.constant 0 : index
    %c0_28 = arith.constant 0 : index
    %c0_29 = arith.constant 0 : index
    %c12_30 = arith.constant 12 : index
    %24 = vector.load %arg2[%c0_27, %c0_28, %c0_29, %c12_30] : memref<1x4x8x140xf32, #tpu.memory_space<vmem>>, vector<1x4x8x128xf32>
    %25 = vector.shape_cast %24 : vector<1x4x8x128xf32> to vector<4x8x128xf32>
    %26 = vector.shape_cast %25 : vector<4x8x128xf32> to vector<4x1024xf32>
    %c24 = arith.constant 24 : index
    %c0_31 = arith.constant 0 : index
    %27 = vector.load %arg6[%c24, %c0_31] : memref<28x1024xf32, #tpu.memory_space<vmem>>, vector<4x1024xf32>
    tpu.vector_store %arg6[%c24, %c0_31], %26 {strides = array<i32>} : memref<28x1024xf32, #tpu.memory_space<vmem>>, vector<4x1024xf32>,
    %c0_32 = arith.constant 0 : index
    %c0_33 = arith.constant 0 : index
    %28 = vector.load %arg3[%c0_32, %c0_33] : memref<8x28xf32, #tpu.memory_space<vmem>>, vector<8x28xf32>
    %c0_34 = arith.constant 0 : index
    %c0_35 = arith.constant 0 : index
    %29 = vector.load %arg6[%c0_34, %c0_35] : memref<28x1024xf32, #tpu.memory_space<vmem>>, vector<28x1024xf32>
    %cst = arith.constant dense<0.000000e+00> : vector<8x1024xf32>
    %30 = tpu.matmul %28, %29, %cst {dimension_numbers = #tpu.dot_dimension_numbers<[1], [0], [0], [1], [0, 0, 1, 1], [], []>} : vector<8x28xf32>, vector<28x1024xf32>, vector<8x1024xf32> -> vector<8x1024xf32>
    %c0_36 = arith.constant 0 : index
    %c0_37 = arith.constant 0 : index
    %31 = vector.load %arg4[%c0_36, %c0_37] : memref<8x1xf32, #tpu.memory_space<vmem>>, vector<8x1xf32>
    %32 = vector.broadcast %31 : vector<8x1xf32> to vector<8x1024xf32>
    %33 = arith.addf %30, %32 : vector<8x1024xf32>
    %c0_38 = arith.constant 0 : index
    %c0_39 = arith.constant 0 : index
    %c0_40 = arith.constant 0 : index
    %34 = vector.load %arg5[%c0_38, %c0_39, %c0_40] : memref<1x8x1024xf32, #tpu.memory_space<vmem>>, vector<1x8x1024xf32>
    %35 = vector.shape_cast %34 : vector<1x8x1024xf32> to vector<8x1024xf32>
    %36 = vector.shape_cast %33 : vector<8x1024xf32> to vector<1x8x1024xf32>
    tpu.vector_store %arg5[%c0_38, %c0_39, %c0_40], %36 {strides = array<i32>} : memref<1x8x1024xf32, #tpu.memory_space<vmem>>, vector<1x8x1024xf32>,
    return
  }
  func.func @transform_0(%arg0: i32, %arg1: i32) -> (i32, i32, i32, i32) {
    %c0_i32 = arith.constant 0 : i32
    %c0_i32_0 = arith.constant 0 : i32
    %c0_i32_1 = arith.constant 0 : i32
    return %arg0, %c0_i32, %arg1, %c0_i32_0 : i32, i32, i32, i32
  }
  func.func @transform_1(%arg0: i32, %arg1: i32) -> (i32, i32) {
    %c0_i32 = arith.constant 0 : i32
    %c0_i32_0 = arith.constant 0 : i32
    %c0_i32_1 = arith.constant 0 : i32
    return %c0_i32, %c0_i32_0 : i32, i32
  }
  func.func @transform_2(%arg0: i32, %arg1: i32) -> (i32, i32) {
    %c0_i32 = arith.constant 0 : i32
    %c0_i32_0 = arith.constant 0 : i32
    %c0_i32_1 = arith.constant 0 : i32
    return %c0_i32, %c0_i32_0 : i32, i32
  }
  func.func @transform_3(%arg0: i32, %arg1: i32) -> (i32, i32, i32) {
    %c0_i32 = arith.constant 0 : i32
    %c0_i32_0 = arith.constant 0 : i32
    return %arg0, %c0_i32, %arg1 : i32, i32, i32
  }
}

</mosaic_0001>

<llo_original>
// kernel: tpu_custom_call.1
$region0: #{tpu_custom_call.1}
  #allocation0 [shape = 'u32[]', space=smem, size = 0x4, offset = 0x4, fixed_abs, tag = 'smem constant byte address 0x4 - core index']
  #allocation1 [shape = 'u32[144,128]{1,0:T(1,128)}', space=vmem, size = 0x12000, scoped, tag = 'internal scratch']
  #allocation2 [shape = 'f32[28,1024]{1,0:T(8,128)}', space=vmem, size = 0x20000, scoped, tag = 'scratch operand']
  %s0 = inlined_call_operand.hbm [shape: f32[2,4,8,140], index: 0, kind: input, shape index: {}]
  %s1 = inlined_call_operand.vmem [shape: f32[8,28], index: 1, kind: input, shape index: {}]
  %s2 = inlined_call_operand.vmem [shape: f32[8,1], index: 2, kind: input, shape index: {}]
  %s3 = inlined_call_operand.hbm [shape: f32[2,8,1024], index: 3, kind: output, shape index: {}]
  %s4 = sld [smem:[#allocation0]]
  $region49: #{tpu_custom_call.1} parent=0
    _
  %s6 = ssub.s32 1, %s4
  %s7 = scalar_select 0, %s6, %s4
  $region1: #{tpu_custom_call.1} parent=0
    #allocation3 [shape = 'u8[65536]{0}', space=vmem, size = 0x10000, scoped, tag = 'input window, operand 0']
    #allocation4 [shape = 's32[2]{0}', space=sflag, size = 0x8, scoped, tag = 'scoped memory for tpu_custom_call.1']
    #allocation5 [shape = 's32[2]{0}', space=sflag, size = 0x8, scoped, tag = 'scoped memory for tpu_custom_call.1']
    #allocation6 [shape = 'u8[65536]{0}', space=vmem, size = 0x10000, scoped, tag = 'output window, operand 0']
    %8 = vsyncpa [#allocation4], 0
    %s9 = scalar_lea.sflag [#allocation4], 1
    %10 = vsyncpa %s9, 0
    %11 = vsyncpa [#allocation5], 0
    %s12 = scalar_lea.sflag [#allocation5], 1
    %13 = vsyncpa %s12, 0
    loop: start=0, step=1, limit=4
    $region2: #{tpu_custom_call.1} parent=1 // loop_pre_header
      _
    $region3: #{tpu_custom_call.1} parent=1 // loop_header
      %s15 = sphi 0, %s19
      %p16 = scmp.ge.s32.totalorder %s15, 4
      %s22 = sphi 0, %s34
      %s23 = sphi 0, %s30
      %s24 = sphi 0, %s22
      %s25 = sphi 0, %s23
      %s26 = sphi 0, %s24
      %s27 = sphi 0, %s25
      %s39 = sphi 0, %s41
      %s42 = sphi 0, %s39
      %s43 = sphi 0, %s42
      %s59 = sphi 0, %s43
      %s63 = sphi 0, %s63
      %s65 = sphi 0, %s63
      %s66 = sphi 0, %s65
      %s80 = sphi 0, %s66
      %s84 = sphi 0, %s84
      %s86 = sphi 0, %s84
      %s87 = sphi 0, %s86
      %s101 = sphi 0, %s87
      %s109 = sphi 0, %s111
      %s112 = sphi 0, %s109
      %s113 = sphi 0, %s112
      %s129 = sphi 0, %s113
    $region4: #{tpu_custom_call.1} parent=1 // loop_header_branch
      %18 = sbr.rel (%p16) target = $region8
    $region5: #{tpu_custom_call.1} parent=1 // loop_body
      %s20 = ssub.s32 %s15, 1
      %s21 = ssub.s32 %s15, 2
      %s28 = sadd.s32 1, %s23
      %p29 = scmp.ge.s32.totalorder %s28, 1
      %s30 = scalar_select %p29, 0, %s28
      %s31 = sadd.s32 1, %s22
      %s32 = scalar_select %p29, %s31, %s22
      %p33 = scmp.ge.s32.totalorder %s32, 2
      %s34 = scalar_select %p33, 0, %s32
      %s35 = ssub.s32 %s22, %s34
      %s36 = ssub.s32 %s23, %s30
      %s37 = sor.u32 %s35, %s36
      %p38 = scmp.eq.s32.totalorder %s37, 0
      %s40 = sadd.s32 %s39, 1
      %s41 = scalar_select %p38, %s39, %s40
      %p44 = pneg %p38
      %p45 = scmp.eq.s32.totalorder %s15, 1
      %p46 = por %p44, %p45
      %p47 = scmp.ne.s32.totalorder %s39, %s42
      %p48 = scmp.eq.s32.totalorder %s15, 0
      %p49 = por %p47, %p48
      %p50 = scmp.ne.s32.totalorder %s39, %s42
      %p51 = scmp.eq.s32.totalorder %s20, 1
      %p52 = por %p50, %p51
      %p53 = scmp.ne.s32.totalorder %s42, %s43
      %p54 = scmp.eq.s32.totalorder %s20, 0
      %p55 = por %p53, %p54
      %p56 = scmp.ne.s32.totalorder %s42, %s43
      %p57 = scmp.eq.s32.totalorder %s21, 1
      %p58 = por %p56, %p57
      %p60 = scmp.ne.s32.totalorder %s43, %s59
      %p61 = scmp.eq.s32.totalorder %s21, 0
      %p62 = por %p60, %p61
      %s64 = sadd.s32 %s63, 1
      %p67 = scmp.eq.s32.totalorder %s15, 1
      %p68 = scmp.ne.s32.totalorder %s63, %s65
      %p69 = scmp.eq.s32.totalorder %s15, 0
      %p70 = por %p68, %p69
      %p71 = scmp.ne.s32.totalorder %s63, %s65
      %p72 = scmp.eq.s32.totalorder %s20, 1
      %p73 = por %p71, %p72
      %p74 = scmp.ne.s32.totalorder %s65, %s66
      %p75 = scmp.eq.s32.totalorder %s20, 0
      %p76 = por %p74, %p75
      %p77 = scmp.ne.s32.totalorder %s65, %s66
      %p78 = scmp.eq.s32.totalorder %s21, 1
      %p79 = por %p77, %p78
      %p81 = scmp.ne.s32.totalorder %s66, %s80
      %p82 = scmp.eq.s32.totalorder %s21, 0
      %p83 = por %p81, %p82
      %s85 = sadd.s32 %s84, 1
      %p88 = scmp.eq.s32.totalorder %s15, 1
      %p89 = scmp.ne.s32.totalorder %s84, %s86
      %p90 = scmp.eq.s32.totalorder %s15, 0
      %p91 = por %p89, %p90
      %p92 = scmp.ne.s32.totalorder %s84, %s86
      %p93 = scmp.eq.s32.totalorder %s20, 1
      %p94 = por %p92, %p93
      %p95 = scmp.ne.s32.totalorder %s86, %s87
      %p96 = scmp.eq.s32.totalorder %s20, 0
      %p97 = por %p95, %p96
      %p98 = scmp.ne.s32.totalorder %s86, %s87
      %p99 = scmp.eq.s32.totalorder %s21, 1
      %p100 = por %p98, %p99
      %p102 = scmp.ne.s32.totalorder %s87, %s101
      %p103 = scmp.eq.s32.totalorder %s21, 0
      %p104 = por %p102, %p103
      %s105 = ssub.s32 %s22, %s34
      %s106 = ssub.s32 %s23, %s30
      %s107 = sor.u32 %s105, %s106
      %p108 = scmp.eq.s32.totalorder %s107, 0
      %s110 = sadd.s32 %s109, 1
      %s111 = scalar_select %p108, %s109, %s110
      %p114 = pneg %p108
      %p115 = scmp.eq.s32.totalorder %s15, 1
      %p116 = por %p114, %p115
      %p117 = scmp.ne.s32.totalorder %s109, %s112
      %p118 = scmp.eq.s32.totalorder %s15, 0
      %p119 = por %p117, %p118
      %p120 = scmp.ne.s32.totalorder %s109, %s112
      %p121 = scmp.eq.s32.totalorder %s20, 1
      %p122 = por %p120, %p121
      %p123 = scmp.ne.s32.totalorder %s112, %s113
      %p124 = scmp.eq.s32.totalorder %s20, 0
      %p125 = por %p123, %p124
      %p126 = scmp.ne.s32.totalorder %s112, %s113
      %p127 = scmp.eq.s32.totalorder %s21, 1
      %p128 = por %p126, %p127
      %p130 = scmp.ne.s32.totalorder %s113, %s129
      %p131 = scmp.eq.s32.totalorder %s21, 0
      %p132 = por %p130, %p131
      %p133 = scmp.le.s32.totalorder 1, %s15
      %p134 = scmp.lt.s32.totalorder %s15, 3
      %p135 = pnand %p133, %p134
      %p136 = pneg %p135
      // Predicated region
      $region9: #{tpu_custom_call.1} parent=5 // pred_check
        _
      $region10: #{tpu_custom_call.1} parent=5 // pred_check_branch
        %138 = sbr.rel (%p135) target = $region12
      $region11: #{tpu_custom_call.1} parent=5 // pred_region
        %s139 = ssub.s32 %s15, 1
        // Predicated region
        $region13: #{tpu_custom_call.1} parent=11 // pred_check
          %p140 = pneg %p76
        $region14: #{tpu_custom_call.1} parent=11 // pred_check_branch
          %142 = sbr.rel (%p140) target = $region16
        $region15: #{tpu_custom_call.1} parent=11 // pred_region
          _
        $region16: #{tpu_custom_call.1} parent=11 // pred_fallthru
          _
        // Predicated region
        $region17: #{tpu_custom_call.1} parent=11 // pred_check
          %p143 = pneg %p97
        $region18: #{tpu_custom_call.1} parent=11 // pred_check_branch
          %145 = sbr.rel (%p143) target = $region20
        $region19: #{tpu_custom_call.1} parent=11 // pred_region
          _
        $region20: #{tpu_custom_call.1} parent=11 // pred_fallthru
          _
      $region12: #{tpu_custom_call.1} parent=5 // pred_fallthru
        _
      %p146 = scmp.lt.s32.totalorder %s15, 2
      // Predicated region
      $region21: #{tpu_custom_call.1} parent=5 // pred_check
        %p147 = pneg %p146
      $region22: #{tpu_custom_call.1} parent=5 // pred_check_branch
        %149 = sbr.rel (%p147) target = $region24
      $region23: #{tpu_custom_call.1} parent=5 // pred_region
        // Predicated region
        $region25: #{tpu_custom_call.1} parent=23 // pred_check
          %p150 = pneg %p49
        $region26: #{tpu_custom_call.1} parent=23 // pred_check_branch
          %152 = sbr.rel (%p150) target = $region28
        $region27: #{tpu_custom_call.1} parent=23 // pred_region
          %s153 = sand.u32 %s39, 1
          %s154 = scalar_lea.sflag [#allocation4], %s153
          %s155 = sand.u32 %s39, 1
          %s156 = smul.addr %s155, 64
          %s157 = scalar_lea.vmem [#allocation3], %s156
          %s159 = ssub.s32 1024, 1024
          %160 = vsyncadd %s154, %s159
          %s161 = smul.addr %s23, 2
          %s162 = smul.addr %s22, 8
          %s163 = sadd.s32 %s161, %s162
          %s164 = smul.addr %s163, 128
          %s165 = scalar_lea.hbm %s0, %s164
          %s166 = sshll.u32 %s157, 4
          %s167 = int_to_ptr.vmem [resolvable:$true] %s166
          %172 = dma.hbm_to_vmem [thread:$0]  %s165, 1024, %s167, %s154, 256, 256, 16
        $region28: #{tpu_custom_call.1} parent=23 // pred_fallthru
          _
      $region24: #{tpu_custom_call.1} parent=5 // pred_fallthru
        _
      %p173 = scmp.le.s32.totalorder 1, %s15
      %p174 = scmp.lt.s32.totalorder %s15, 3
      %p175 = pnand %p173, %p174
      %p176 = pneg %p175
      // Predicated region
      $region29: #{tpu_custom_call.1} parent=5 // pred_check
        _
      $region30: #{tpu_custom_call.1} parent=5 // pred_check_branch
        %178 = sbr.rel (%p175) target = $region32
      $region31: #{tpu_custom_call.1} parent=5 // pred_region
        %s179 = ssub.s32 %s15, 1
        %s180 = sand.u32 %s42, 1
        %s181 = scalar_lea.sflag [#allocation4], %s180
        %s182 = sand.u32 %s42, 1
        %s183 = smul.addr %s182, 64
        %s184 = scalar_lea.vmem [#allocation3], %s183
        // Predicated region
        $region33: #{tpu_custom_call.1} parent=31 // pred_check
          %p185 = pneg %p55
        $region34: #{tpu_custom_call.1} parent=31 // pred_check_branch
          %187 = sbr.rel (%p185) target = $region36
        $region35: #{tpu_custom_call.1} parent=31 // pred_region
          %188 = dma.done %s181, 1024
        $region36: #{tpu_custom_call.1} parent=31 // pred_fallthru
          _
        %s189 = sand.u32 %s42, 1
        %s190 = scalar_lea.sflag [#allocation4], %s189
        %s191 = sand.u32 %s42, 1
        %s192 = smul.addr %s191, 64
        %s193 = scalar_lea.vmem [#allocation3], %s192
        %p194 = pneg %p55
        %p195 = pneg %p52
        %p196 = pneg %p76
        %p197 = pneg %p73
        %p198 = pneg %p97
        %p199 = pneg %p94
        %p200 = pneg %p125
        %p201 = pneg %p122
        %s202 = sand.u32 %s112, 1
        %s203 = scalar_lea.sflag [#allocation5], %s202
        %s204 = sand.u32 %s112, 1
        %s205 = smul.addr %s204, 64
        %s206 = scalar_lea.vmem [#allocation6], %s205
        %s207 = smul.u32 8, %s25
        %v208 = vld [vmem:[%s184] sm:$0xff]
        %v209 = vld [vmem:[%s184 + $0x10] sm:$0xff]
        %v210 = vld [vmem:[%s184 + $0x20] sm:$0xff]
        %v211 = vld [vmem:[%s184 + $0x30] sm:$0xff]
        %v212 = vcombine.low %v208, %v210
        %v213 = vcombine.high %v208, %v210
        %v215 = vunpack.c.l.s4 1983009808
        %v216 = vunpack.c.0.s8 %v215
        %v217 = vlaneseq
        %v218 = vshrl.u32 %v217, 7
        %v219 = vsub.s32 %v216, %v218
        %v220 = vrot.slane %v212, %v219
        %v222 = vunpack.c.l.s4 1983009808
        %v223 = vunpack.c.0.s8 %v222
        %v224 = vlaneseq
        %v225 = vshrl.u32 %v224, 7
        %v226 = vsub.s32 %v223, %v225
        %v227 = vrot.slane %v213, %v226
        %v228 = vcombine.low %v209, %v211
        %v229 = vcombine.high %v209, %v211
        %v231 = vunpack.c.l.s4 1983009808
        %v232 = vunpack.c.0.s8 %v231
        %v233 = vlaneseq
        %v234 = vshrl.u32 %v233, 7
        %v235 = vsub.s32 %v232, %v234
        %v236 = vrot.slane %v228, %v235
        %v238 = vunpack.c.l.s4 1983009808
        %v239 = vunpack.c.0.s8 %v238
        %v240 = vlaneseq
        %v241 = vshrl.u32 %v240, 7
        %v242 = vsub.s32 %v239, %v241
        %v243 = vrot.slane %v229, %v242
        %v244 = vcombine.low %v220, %v236
        %v245 = vcombine.high %v220, %v236
        %v247 = vunpack.c.l.s4 1934713408
        %v248 = vunpack.c.0.s8 %v247
        %v249 = vlaneseq
        %v250 = vshrl.u32 %v249, 7
        %v251 = vsub.s32 %v248, %v250
        %v252 = vrot.slane %v244, %v251
        %v254 = vunpack.c.l.s4 1934713408
        %v255 = vunpack.c.0.s8 %v254
        %v256 = vlaneseq
        %v257 = vshrl.u32 %v256, 7
        %v258 = vsub.s32 %v255, %v257
        %v259 = vrot.slane %v245, %v258
        %v260 = vcombine.low %v227, %v243
        %v261 = vcombine.high %v227, %v243
        %v263 = vunpack.c.l.s4 1934713408
        %v264 = vunpack.c.0.s8 %v263
        %v265 = vlaneseq
        %v266 = vshrl.u32 %v265, 7
        %v267 = vsub.s32 %v264, %v266
        %v268 = vrot.slane %v260, %v267
        %v270 = vunpack.c.l.s4 1934713408
        %v271 = vunpack.c.0.s8 %v270
        %v272 = vlaneseq
        %v273 = vshrl.u32 %v272, 7
        %v274 = vsub.s32 %v271, %v273
        %v275 = vrot.slane %v261, %v274
        %v276 = vcombine.high %v252, 0.0
        %v277 = vcombine.high %v259, 0.0
        %v278 = vcombine.high %v268, 0.0
        %v279 = vcombine.high %v275, 0.0
        %280 = vst [vmem:[#allocation2] sm:$0xf] %v252
        %281 = vst [vmem:[#allocation2 + $0x8] sm:$0xf] %v276
        %282 = vst [vmem:[#allocation2 + $0x10] sm:$0xf] %v259
        %283 = vst [vmem:[#allocation2 + $0x18] sm:$0xf] %v277
        %284 = vst [vmem:[#allocation2 + $0x20] sm:$0xf] %v268
        %285 = vst [vmem:[#allocation2 + $0x28] sm:$0xf] %v278
        %286 = vst [vmem:[#allocation2 + $0x30] sm:$0xf] %v275
        %287 = vst [vmem:[#allocation2 + $0x38] sm:$0xf] %v279
        %v288 = vld [vmem:[%s184] sm:$0xff]
        %v289 = vld [vmem:[%s184 + $0x8] sm:$0xff]
        %v290 = vld [vmem:[%s184 + $0x10] sm:$0xff]
        %v291 = vld [vmem:[%s184 + $0x18] sm:$0xff]
        %v292 = vld [vmem:[%s184 + $0x20] sm:$0xff]
        %v293 = vld [vmem:[%s184 + $0x28] sm:$0xff]
        %v294 = vld [vmem:[%s184 + $0x30] sm:$0xff]
        %v295 = vld [vmem:[%s184 + $0x38] sm:$0xff]
        %304 = vrot.lane.b32.xlu0 %v288, 126
        %v305 = vpop.permute.xlu0 %304
        %306 = vrot.lane.b32.xlu0 %v289, 126
        %v307 = vpop.permute.xlu0 %306
        %308 = vrot.lane.b32.xlu0 %v290, 126
        %v309 = vpop.permute.xlu0 %308
        %310 = vrot.lane.b32.xlu0 %v291, 126
        %v311 = vpop.permute.xlu0 %310
        %312 = vrot.lane.b32.xlu0 %v292, 126
        %v313 = vpop.permute.xlu0 %312
        %314 = vrot.lane.b32.xlu0 %v293, 126
        %v315 = vpop.permute.xlu0 %314
        %316 = vrot.lane.b32.xlu0 %v294, 126
        %v317 = vpop.permute.xlu0 %316
        %318 = vrot.lane.b32.xlu0 %v295, 126
        %v319 = vpop.permute.xlu0 %318
        %vm320 = vcmask 1031168
        %v321 = vsel %vm320, %v305, %v307
        %v322 = vsel %vm320, %v309, %v311
        %v323 = vsel %vm320, %v313, %v315
        %v324 = vsel %vm320, %v317, %v319
        %v329 = vcombine.low %v321, %v323
        %v330 = vcombine.high %v321, %v323
        %v332 = vunpack.c.l.s4 1983009808
        %v333 = vunpack.c.0.s8 %v332
        %v334 = vlaneseq
        %v335 = vshrl.u32 %v334, 7
        %v336 = vsub.s32 %v333, %v335
        %v337 = vrot.slane %v329, %v336
        %v339 = vunpack.c.l.s4 1983009808
        %v340 = vunpack.c.0.s8 %v339
        %v341 = vlaneseq
        %v342 = vshrl.u32 %v341, 7
        %v343 = vsub.s32 %v340, %v342
        %v344 = vrot.slane %v330, %v343
        %v345 = vcombine.low %v322, %v324
        %v346 = vcombine.high %v322, %v324
        %v348 = vunpack.c.l.s4 1983009808
        %v349 = vunpack.c.0.s8 %v348
        %v350 = vlaneseq
        %v351 = vshrl.u32 %v350, 7
        %v352 = vsub.s32 %v349, %v351
        %v353 = vrot.slane %v345, %v352
        %v355 = vunpack.c.l.s4 1983009808
        %v356 = vunpack.c.0.s8 %v355
        %v357 = vlaneseq
        %v358 = vshrl.u32 %v357, 7
        %v359 = vsub.s32 %v356, %v358
        %v360 = vrot.slane %v346, %v359
        %v361 = vcombine.low %v337, %v353
        %v362 = vcombine.high %v337, %v353
        %v364 = vunpack.c.l.s4 1934713408
        %v365 = vunpack.c.0.s8 %v364
        %v366 = vlaneseq
        %v367 = vshrl.u32 %v366, 7
        %v368 = vsub.s32 %v365, %v367
        %v369 = vrot.slane %v361, %v368
        %v371 = vunpack.c.l.s4 1934713408
        %v372 = vunpack.c.0.s8 %v371
        %v373 = vlaneseq
        %v374 = vshrl.u32 %v373, 7
        %v375 = vsub.s32 %v372, %v374
        %v376 = vrot.slane %v362, %v375
        %v377 = vcombine.low %v344, %v360
        %v378 = vcombine.high %v344, %v360
        %v380 = vunpack.c.l.s4 1934713408
        %v381 = vunpack.c.0.s8 %v380
        %v382 = vlaneseq
        %v383 = vshrl.u32 %v382, 7
        %v384 = vsub.s32 %v381, %v383
        %v385 = vrot.slane %v377, %v384
        %v387 = vunpack.c.l.s4 1934713408
        %v388 = vunpack.c.0.s8 %v387
        %v389 = vlaneseq
        %v390 = vshrl.u32 %v389, 7
        %v391 = vsub.s32 %v388, %v390
        %v392 = vrot.slane %v378, %v391
        %v393 = vcombine.high %v369, 0.0
        %v394 = vcombine.high %v376, 0.0
        %v395 = vcombine.high %v385, 0.0
        %v396 = vcombine.high %v392, 0.0
        %v405 = vrot.slane %v369, 4
        %v406 = vrot.slane %v393, 4
        %v407 = vrot.slane %v376, 4
        %v408 = vrot.slane %v394, 4
        %v409 = vrot.slane %v385, 4
        %v410 = vrot.slane %v395, 4
        %v411 = vrot.slane %v392, 4
        %v412 = vrot.slane %v396, 4
        %421 = vst [vmem:[#allocation2] sm:$0xf0] %v405
        %422 = vst [vmem:[#allocation2 + $0x8] sm:$0xf0] %v406
        %423 = vst [vmem:[#allocation2 + $0x10] sm:$0xf0] %v407
        %424 = vst [vmem:[#allocation2 + $0x18] sm:$0xf0] %v408
        %425 = vst [vmem:[#allocation2 + $0x20] sm:$0xf0] %v409
        %426 = vst [vmem:[#allocation2 + $0x28] sm:$0xf0] %v410
        %427 = vst [vmem:[#allocation2 + $0x30] sm:$0xf0] %v411
        %428 = vst [vmem:[#allocation2 + $0x38] sm:$0xf0] %v412
        %v429 = vld [vmem:[%s184] sm:$0xff]
        %v430 = vld [vmem:[%s184 + $0x8] sm:$0xff]
        %v431 = vld [vmem:[%s184 + $0x10] sm:$0xff]
        %v432 = vld [vmem:[%s184 + $0x18] sm:$0xff]
        %v433 = vld [vmem:[%s184 + $0x20] sm:$0xff]
        %v434 = vld [vmem:[%s184 + $0x28] sm:$0xff]
        %v435 = vld [vmem:[%s184 + $0x30] sm:$0xff]
        %v436 = vld [vmem:[%s184 + $0x38] sm:$0xff]
        %445 = vrot.lane.b32.xlu0 %v429, 124
        %v446 = vpop.permute.xlu0 %445
        %447 = vrot.lane.b32.xlu0 %v430, 124
        %v448 = vpop.permute.xlu0 %447
        %449 = vrot.lane.b32.xlu0 %v431, 124
        %v450 = vpop.permute.xlu0 %449
        %451 = vrot.lane.b32.xlu0 %v432, 124
        %v452 = vpop.permute.xlu0 %451
        %453 = vrot.lane.b32.xlu0 %v433, 124
        %v454 = vpop.permute.xlu0 %453
        %455 = vrot.lane.b32.xlu0 %v434, 124
        %v456 = vpop.permute.xlu0 %455
        %457 = vrot.lane.b32.xlu0 %v435, 124
        %v458 = vpop.permute.xlu0 %457
        %459 = vrot.lane.b32.xlu0 %v436, 124
        %v460 = vpop.permute.xlu0 %459
        %vm461 = vcmask 1014784
        %v462 = vsel %vm461, %v446, %v448
        %v463 = vsel %vm461, %v450, %v452
        %v464 = vsel %vm461, %v454, %v456
        %v465 = vsel %vm461, %v458, %v460
        %v470 = vcombine.low %v462, %v464
        %v471 = vcombine.high %v462, %v464
        %v473 = vunpack.c.l.s4 1983009808
        %v474 = vunpack.c.0.s8 %v473
        %v475 = vlaneseq
        %v476 = vshrl.u32 %v475, 7
        %v477 = vsub.s32 %v474, %v476
        %v478 = vrot.slane %v470, %v477
        %v480 = vunpack.c.l.s4 1983009808
        %v481 = vunpack.c.0.s8 %v480
        %v482 = vlaneseq
        %v483 = vshrl.u32 %v482, 7
        %v484 = vsub.s32 %v481, %v483
        %v485 = vrot.slane %v471, %v484
        %v486 = vcombine.low %v463, %v465
        %v487 = vcombine.high %v463, %v465
        %v489 = vunpack.c.l.s4 1983009808
        %v490 = vunpack.c.0.s8 %v489
        %v491 = vlaneseq
        %v492 = vshrl.u32 %v491, 7
        %v493 = vsub.s32 %v490, %v492
        %v494 = vrot.slane %v486, %v493
        %v496 = vunpack.c.l.s4 1983009808
        %v497 = vunpack.c.0.s8 %v496
        %v498 = vlaneseq
        %v499 = vshrl.u32 %v498, 7
        %v500 = vsub.s32 %v497, %v499
        %v501 = vrot.slane %v487, %v500
        %v502 = vcombine.low %v478, %v494
        %v503 = vcombine.high %v478, %v494
        %v505 = vunpack.c.l.s4 1934713408
        %v506 = vunpack.c.0.s8 %v505
        %v507 = vlaneseq
        %v508 = vshrl.u32 %v507, 7
        %v509 = vsub.s32 %v506, %v508
        %v510 = vrot.slane %v502, %v509
        %v512 = vunpack.c.l.s4 1934713408
        %v513 = vunpack.c.0.s8 %v512
        %v514 = vlaneseq
        %v515 = vshrl.u32 %v514, 7
        %v516 = vsub.s32 %v513, %v515
        %v517 = vrot.slane %v503, %v516
        %v518 = vcombine.low %v485, %v501
        %v519 = vcombine.high %v485, %v501
        %v521 = vunpack.c.l.s4 1934713408
        %v522 = vunpack.c.0.s8 %v521
        %v523 = vlaneseq
        %v524 = vshrl.u32 %v523, 7
        %v525 = vsub.s32 %v522, %v524
        %v526 = vrot.slane %v518, %v525
        %v528 = vunpack.c.l.s4 1934713408
        %v529 = vunpack.c.0.s8 %v528
        %v530 = vlaneseq
        %v531 = vshrl.u32 %v530, 7
        %v532 = vsub.s32 %v529, %v531
        %v533 = vrot.slane %v519, %v532
        %v534 = vcombine.high %v510, 0.0
        %v535 = vcombine.high %v517, 0.0
        %v536 = vcombine.high %v526, 0.0
        %v537 = vcombine.high %v533, 0.0
        %538 = vst [vmem:[#allocation2 + $0x40] sm:$0xf] %v510
        %539 = vst [vmem:[#allocation2 + $0x48] sm:$0xf] %v534
        %540 = vst [vmem:[#allocation2 + $0x50] sm:$0xf] %v517
        %541 = vst [vmem:[#allocation2 + $0x58] sm:$0xf] %v535
        %542 = vst [vmem:[#allocation2 + $0x60] sm:$0xf] %v526
        %543 = vst [vmem:[#allocation2 + $0x68] sm:$0xf] %v536
        %544 = vst [vmem:[#allocation2 + $0x70] sm:$0xf] %v533
        %545 = vst [vmem:[#allocation2 + $0x78] sm:$0xf] %v537
        %v546 = vld [vmem:[%s184] sm:$0xff]
        %v547 = vld [vmem:[%s184 + $0x8] sm:$0xff]
        %v548 = vld [vmem:[%s184 + $0x10] sm:$0xff]
        %v549 = vld [vmem:[%s184 + $0x18] sm:$0xff]
        %v550 = vld [vmem:[%s184 + $0x20] sm:$0xff]
        %v551 = vld [vmem:[%s184 + $0x28] sm:$0xff]
        %v552 = vld [vmem:[%s184 + $0x30] sm:$0xff]
        %v553 = vld [vmem:[%s184 + $0x38] sm:$0xff]
        %562 = vrot.lane.b32.xlu0 %v546, 122
        %v563 = vpop.permute.xlu0 %562
        %564 = vrot.lane.b32.xlu0 %v547, 122
        %v565 = vpop.permute.xlu0 %564
        %566 = vrot.lane.b32.xlu0 %v548, 122
        %v567 = vpop.permute.xlu0 %566
        %568 = vrot.lane.b32.xlu0 %v549, 122
        %v569 = vpop.permute.xlu0 %568
        %570 = vrot.lane.b32.xlu0 %v550, 122
        %v571 = vpop.permute.xlu0 %570
        %572 = vrot.lane.b32.xlu0 %v551, 122
        %v573 = vpop.permute.xlu0 %572
        %574 = vrot.lane.b32.xlu0 %v552, 122
        %v575 = vpop.permute.xlu0 %574
        %576 = vrot.lane.b32.xlu0 %v553, 122
        %v577 = vpop.permute.xlu0 %576
        %vm578 = vcmask 998400
        %v579 = vsel %vm578, %v563, %v565
        %v580 = vsel %vm578, %v567, %v569
        %v581 = vsel %vm578, %v571, %v573
        %v582 = vsel %vm578, %v575, %v577
        %v587 = vcombine.low %v579, %v581
        %v588 = vcombine.high %v579, %v581
        %v590 = vunpack.c.l.s4 1983009808
        %v591 = vunpack.c.0.s8 %v590
        %v592 = vlaneseq
        %v593 = vshrl.u32 %v592, 7
        %v594 = vsub.s32 %v591, %v593
        %v595 = vrot.slane %v587, %v594
        %v597 = vunpack.c.l.s4 1983009808
        %v598 = vunpack.c.0.s8 %v597
        %v599 = vlaneseq
        %v600 = vshrl.u32 %v599, 7
        %v601 = vsub.s32 %v598, %v600
        %v602 = vrot.slane %v588, %v601
        %v603 = vcombine.low %v580, %v582
        %v604 = vcombine.high %v580, %v582
        %v606 = vunpack.c.l.s4 1983009808
        %v607 = vunpack.c.0.s8 %v606
        %v608 = vlaneseq
        %v609 = vshrl.u32 %v608, 7
        %v610 = vsub.s32 %v607, %v609
        %v611 = vrot.slane %v603, %v610
        %v613 = vunpack.c.l.s4 1983009808
        %v614 = vunpack.c.0.s8 %v613
        %v615 = vlaneseq
        %v616 = vshrl.u32 %v615, 7
        %v617 = vsub.s32 %v614, %v616
        %v618 = vrot.slane %v604, %v617
        %v619 = vcombine.low %v595, %v611
        %v620 = vcombine.high %v595, %v611
        %v622 = vunpack.c.l.s4 1934713408
        %v623 = vunpack.c.0.s8 %v622
        %v624 = vlaneseq
        %v625 = vshrl.u32 %v624, 7
        %v626 = vsub.s32 %v623, %v625
        %v627 = vrot.slane %v619, %v626
        %v629 = vunpack.c.l.s4 1934713408
        %v630 = vunpack.c.0.s8 %v629
        %v631 = vlaneseq
        %v632 = vshrl.u32 %v631, 7
        %v633 = vsub.s32 %v630, %v632
        %v634 = vrot.slane %v620, %v633
        %v635 = vcombine.low %v602, %v618
        %v636 = vcombine.high %v602, %v618
        %v638 = vunpack.c.l.s4 1934713408
        %v639 = vunpack.c.0.s8 %v638
        %v640 = vlaneseq
        %v641 = vshrl.u32 %v640, 7
        %v642 = vsub.s32 %v639, %v641
        %v643 = vrot.slane %v635, %v642
        %v645 = vunpack.c.l.s4 1934713408
        %v646 = vunpack.c.0.s8 %v645
        %v647 = vlaneseq
        %v648 = vshrl.u32 %v647, 7
        %v649 = vsub.s32 %v646, %v648
        %v650 = vrot.slane %v636, %v649
        %v651 = vcombine.high %v627, 0.0
        %v652 = vcombine.high %v634, 0.0
        %v653 = vcombine.high %v643, 0.0
        %v654 = vcombine.high %v650, 0.0
        %v663 = vrot.slane %v627, 4
        %v664 = vrot.slane %v651, 4
        %v665 = vrot.slane %v634, 4
        %v666 = vrot.slane %v652, 4
        %v667 = vrot.slane %v643, 4
        %v668 = vrot.slane %v653, 4
        %v669 = vrot.slane %v650, 4
        %v670 = vrot.slane %v654, 4
        %679 = vst [vmem:[#allocation2 + $0x40] sm:$0xf0] %v663
        %680 = vst [vmem:[#allocation2 + $0x48] sm:$0xf0] %v664
        %681 = vst [vmem:[#allocation2 + $0x50] sm:$0xf0] %v665
        %682 = vst [vmem:[#allocation2 + $0x58] sm:$0xf0] %v666
        %683 = vst [vmem:[#allocation2 + $0x60] sm:$0xf0] %v667
        %684 = vst [vmem:[#allocation2 + $0x68] sm:$0xf0] %v668
        %685 = vst [vmem:[#allocation2 + $0x70] sm:$0xf0] %v669
        %686 = vst [vmem:[#allocation2 + $0x78] sm:$0xf0] %v670
        %v687 = vld [vmem:[%s184] sm:$0xff]
        %v688 = vld [vmem:[%s184 + $0x8] sm:$0xff]
        %v689 = vld [vmem:[%s184 + $0x10] sm:$0xff]
        %v690 = vld [vmem:[%s184 + $0x18] sm:$0xff]
        %v691 = vld [vmem:[%s184 + $0x20] sm:$0xff]
        %v692 = vld [vmem:[%s184 + $0x28] sm:$0xff]
        %v693 = vld [vmem:[%s184 + $0x30] sm:$0xff]
        %v694 = vld [vmem:[%s184 + $0x38] sm:$0xff]
        %703 = vrot.lane.b32.xlu0 %v687, 120
        %v704 = vpop.permute.xlu0 %703
        %705 = vrot.lane.b32.xlu0 %v688, 120
        %v706 = vpop.permute.xlu0 %705
        %707 = vrot.lane.b32.xlu0 %v689, 120
        %v708 = vpop.permute.xlu0 %707
        %709 = vrot.lane.b32.xlu0 %v690, 120
        %v710 = vpop.permute.xlu0 %709
        %711 = vrot.lane.b32.xlu0 %v691, 120
        %v712 = vpop.permute.xlu0 %711
        %713 = vrot.lane.b32.xlu0 %v692, 120
        %v714 = vpop.permute.xlu0 %713
        %715 = vrot.lane.b32.xlu0 %v693, 120
        %v716 = vpop.permute.xlu0 %715
        %717 = vrot.lane.b32.xlu0 %v694, 120
        %v718 = vpop.permute.xlu0 %717
        %vm719 = vcmask 982016
        %v720 = vsel %vm719, %v704, %v706
        %v721 = vsel %vm719, %v708, %v710
        %v722 = vsel %vm719, %v712, %v714
        %v723 = vsel %vm719, %v716, %v718
        %v728 = vcombine.low %v720, %v722
        %v729 = vcombine.high %v720, %v722
        %v731 = vunpack.c.l.s4 1983009808
        %v732 = vunpack.c.0.s8 %v731
        %v733 = vlaneseq
        %v734 = vshrl.u32 %v733, 7
        %v735 = vsub.s32 %v732, %v734
        %v736 = vrot.slane %v728, %v735
        %v738 = vunpack.c.l.s4 1983009808
        %v739 = vunpack.c.0.s8 %v738
        %v740 = vlaneseq
        %v741 = vshrl.u32 %v740, 7
        %v742 = vsub.s32 %v739, %v741
        %v743 = vrot.slane %v729, %v742
        %v744 = vcombine.low %v721, %v723
        %v745 = vcombine.high %v721, %v723
        %v747 = vunpack.c.l.s4 1983009808
        %v748 = vunpack.c.0.s8 %v747
        %v749 = vlaneseq
        %v750 = vshrl.u32 %v749, 7
        %v751 = vsub.s32 %v748, %v750
        %v752 = vrot.slane %v744, %v751
        %v754 = vunpack.c.l.s4 1983009808
        %v755 = vunpack.c.0.s8 %v754
        %v756 = vlaneseq
        %v757 = vshrl.u32 %v756, 7
        %v758 = vsub.s32 %v755, %v757
        %v759 = vrot.slane %v745, %v758
        %v760 = vcombine.low %v736, %v752
        %v761 = vcombine.high %v736, %v752
        %v763 = vunpack.c.l.s4 1934713408
        %v764 = vunpack.c.0.s8 %v763
        %v765 = vlaneseq
        %v766 = vshrl.u32 %v765, 7
        %v767 = vsub.s32 %v764, %v766
        %v768 = vrot.slane %v760, %v767
        %v770 = vunpack.c.l.s4 1934713408
        %v771 = vunpack.c.0.s8 %v770
        %v772 = vlaneseq
        %v773 = vshrl.u32 %v772, 7
        %v774 = vsub.s32 %v771, %v773
        %v775 = vrot.slane %v761, %v774
        %v776 = vcombine.low %v743, %v759
        %v777 = vcombine.high %v743, %v759
        %v779 = vunpack.c.l.s4 1934713408
        %v780 = vunpack.c.0.s8 %v779
        %v781 = vlaneseq
        %v782 = vshrl.u32 %v781, 7
        %v783 = vsub.s32 %v780, %v782
        %v784 = vrot.slane %v776, %v783
        %v786 = vunpack.c.l.s4 1934713408
        %v787 = vunpack.c.0.s8 %v786
        %v788 = vlaneseq
        %v789 = vshrl.u32 %v788, 7
        %v790 = vsub.s32 %v787, %v789
        %v791 = vrot.slane %v777, %v790
        %v792 = vcombine.high %v768, 0.0
        %v793 = vcombine.high %v775, 0.0
        %v794 = vcombine.high %v784, 0.0
        %v795 = vcombine.high %v791, 0.0
        %796 = vst [vmem:[#allocation2 + $0x80] sm:$0xf] %v768
        %797 = vst [vmem:[#allocation2 + $0x88] sm:$0xf] %v792
        %798 = vst [vmem:[#allocation2 + $0x90] sm:$0xf] %v775
        %799 = vst [vmem:[#allocation2 + $0x98] sm:$0xf] %v793
        %800 = vst [vmem:[#allocation2 + $0xa0] sm:$0xf] %v784
        %801 = vst [vmem:[#allocation2 + $0xa8] sm:$0xf] %v794
        %802 = vst [vmem:[#allocation2 + $0xb0] sm:$0xf] %v791
        %803 = vst [vmem:[#allocation2 + $0xb8] sm:$0xf] %v795
        %v804 = vld [vmem:[%s184] sm:$0xff]
        %v805 = vld [vmem:[%s184 + $0x8] sm:$0xff]
        %v806 = vld [vmem:[%s184 + $0x10] sm:$0xff]
        %v807 = vld [vmem:[%s184 + $0x18] sm:$0xff]
        %v808 = vld [vmem:[%s184 + $0x20] sm:$0xff]
        %v809 = vld [vmem:[%s184 + $0x28] sm:$0xff]
        %v810 = vld [vmem:[%s184 + $0x30] sm:$0xff]
        %v811 = vld [vmem:[%s184 + $0x38] sm:$0xff]
        %820 = vrot.lane.b32.xlu0 %v804, 118
        %v821 = vpop.permute.xlu0 %820
        %822 = vrot.lane.b32.xlu0 %v805, 118
        %v823 = vpop.permute.xlu0 %822
        %824 = vrot.lane.b32.xlu0 %v806, 118
        %v825 = vpop.permute.xlu0 %824
        %826 = vrot.lane.b32.xlu0 %v807, 118
        %v827 = vpop.permute.xlu0 %826
        %828 = vrot.lane.b32.xlu0 %v808, 118
        %v829 = vpop.permute.xlu0 %828
        %830 = vrot.lane.b32.xlu0 %v809, 118
        %v831 = vpop.permute.xlu0 %830
        %832 = vrot.lane.b32.xlu0 %v810, 118
        %v833 = vpop.permute.xlu0 %832
        %834 = vrot.lane.b32.xlu0 %v811, 118
        %v835 = vpop.permute.xlu0 %834
        %vm836 = vcmask 965632
        %v837 = vsel %vm836, %v821, %v823
        %v838 = vsel %vm836, %v825, %v827
        %v839 = vsel %vm836, %v829, %v831
        %v840 = vsel %vm836, %v833, %v835
        %v845 = vcombine.low %v837, %v839
        %v846 = vcombine.high %v837, %v839
        %v848 = vunpack.c.l.s4 1983009808
        %v849 = vunpack.c.0.s8 %v848
        %v850 = vlaneseq
        %v851 = vshrl.u32 %v850, 7
        %v852 = vsub.s32 %v849, %v851
        %v853 = vrot.slane %v845, %v852
        %v855 = vunpack.c.l.s4 1983009808
        %v856 = vunpack.c.0.s8 %v855
        %v857 = vlaneseq
        %v858 = vshrl.u32 %v857, 7
        %v859 = vsub.s32 %v856, %v858
        %v860 = vrot.slane %v846, %v859
        %v861 = vcombine.low %v838, %v840
        %v862 = vcombine.high %v838, %v840
        %v864 = vunpack.c.l.s4 1983009808
        %v865 = vunpack.c.0.s8 %v864
        %v866 = vlaneseq
        %v867 = vshrl.u32 %v866, 7
        %v868 = vsub.s32 %v865, %v867
        %v869 = vrot.slane %v861, %v868
        %v871 = vunpack.c.l.s4 1983009808
        %v872 = vunpack.c.0.s8 %v871
        %v873 = vlaneseq
        %v874 = vshrl.u32 %v873, 7
        %v875 = vsub.s32 %v872, %v874
        %v876 = vrot.slane %v862, %v875
        %v877 = vcombine.low %v853, %v869
        %v878 = vcombine.high %v853, %v869
        %v880 = vunpack.c.l.s4 1934713408
        %v881 = vunpack.c.0.s8 %v880
        %v882 = vlaneseq
        %v883 = vshrl.u32 %v882, 7
        %v884 = vsub.s32 %v881, %v883
        %v885 = vrot.slane %v877, %v884
        %v887 = vunpack.c.l.s4 1934713408
        %v888 = vunpack.c.0.s8 %v887
        %v889 = vlaneseq
        %v890 = vshrl.u32 %v889, 7
        %v891 = vsub.s32 %v888, %v890
        %v892 = vrot.slane %v878, %v891
        %v893 = vcombine.low %v860, %v876
        %v894 = vcombine.high %v860, %v876
        %v896 = vunpack.c.l.s4 1934713408
        %v897 = vunpack.c.0.s8 %v896
        %v898 = vlaneseq
        %v899 = vshrl.u32 %v898, 7
        %v900 = vsub.s32 %v897, %v899
        %v901 = vrot.slane %v893, %v900
        %v903 = vunpack.c.l.s4 1934713408
        %v904 = vunpack.c.0.s8 %v903
        %v905 = vlaneseq
        %v906 = vshrl.u32 %v905, 7
        %v907 = vsub.s32 %v904, %v906
        %v908 = vrot.slane %v894, %v907
        %v909 = vcombine.high %v885, 0.0
        %v910 = vcombine.high %v892, 0.0
        %v911 = vcombine.high %v901, 0.0
        %v912 = vcombine.high %v908, 0.0
        %v921 = vrot.slane %v885, 4
        %v922 = vrot.slane %v909, 4
        %v923 = vrot.slane %v892, 4
        %v924 = vrot.slane %v910, 4
        %v925 = vrot.slane %v901, 4
        %v926 = vrot.slane %v911, 4
        %v927 = vrot.slane %v908, 4
        %v928 = vrot.slane %v912, 4
        %937 = vst [vmem:[#allocation2 + $0x80] sm:$0xf0] %v921
        %938 = vst [vmem:[#allocation2 + $0x88] sm:$0xf0] %v922
        %939 = vst [vmem:[#allocation2 + $0x90] sm:$0xf0] %v923
        %940 = vst [vmem:[#allocation2 + $0x98] sm:$0xf0] %v924
        %941 = vst [vmem:[#allocation2 + $0xa0] sm:$0xf0] %v925
        %942 = vst [vmem:[#allocation2 + $0xa8] sm:$0xf0] %v926
        %943 = vst [vmem:[#allocation2 + $0xb0] sm:$0xf0] %v927
        %944 = vst [vmem:[#allocation2 + $0xb8] sm:$0xf0] %v928
        %v945 = vld [vmem:[%s184] sm:$0xff]
        %v946 = vld [vmem:[%s184 + $0x8] sm:$0xff]
        %v947 = vld [vmem:[%s184 + $0x10] sm:$0xff]
        %v948 = vld [vmem:[%s184 + $0x18] sm:$0xff]
        %v949 = vld [vmem:[%s184 + $0x20] sm:$0xff]
        %v950 = vld [vmem:[%s184 + $0x28] sm:$0xff]
        %v951 = vld [vmem:[%s184 + $0x30] sm:$0xff]
        %v952 = vld [vmem:[%s184 + $0x38] sm:$0xff]
        %961 = vrot.lane.b32.xlu0 %v945, 116
        %v962 = vpop.permute.xlu0 %961
        %963 = vrot.lane.b32.xlu0 %v946, 116
        %v964 = vpop.permute.xlu0 %963
        %965 = vrot.lane.b32.xlu0 %v947, 116
        %v966 = vpop.permute.xlu0 %965
        %967 = vrot.lane.b32.xlu0 %v948, 116
        %v968 = vpop.permute.xlu0 %967
        %969 = vrot.lane.b32.xlu0 %v949, 116
        %v970 = vpop.permute.xlu0 %969
        %971 = vrot.lane.b32.xlu0 %v950, 116
        %v972 = vpop.permute.xlu0 %971
        %973 = vrot.lane.b32.xlu0 %v951, 116
        %v974 = vpop.permute.xlu0 %973
        %975 = vrot.lane.b32.xlu0 %v952, 116
        %v976 = vpop.permute.xlu0 %975
        %vm977 = vcmask 949248
        %v978 = vsel %vm977, %v962, %v964
        %v979 = vsel %vm977, %v966, %v968
        %v980 = vsel %vm977, %v970, %v972
        %v981 = vsel %vm977, %v974, %v976
        %v986 = vcombine.low %v978, %v980
        %v987 = vcombine.high %v978, %v980
        %v989 = vunpack.c.l.s4 1983009808
        %v990 = vunpack.c.0.s8 %v989
        %v991 = vlaneseq
        %v992 = vshrl.u32 %v991, 7
        %v993 = vsub.s32 %v990, %v992
        %v994 = vrot.slane %v986, %v993
        %v996 = vunpack.c.l.s4 1983009808
        %v997 = vunpack.c.0.s8 %v996
        %v998 = vlaneseq
        %v999 = vshrl.u32 %v998, 7
        %v1000 = vsub.s32 %v997, %v999
        %v1001 = vrot.slane %v987, %v1000
        %v1002 = vcombine.low %v979, %v981
        %v1003 = vcombine.high %v979, %v981
        %v1005 = vunpack.c.l.s4 1983009808
        %v1006 = vunpack.c.0.s8 %v1005
        %v1007 = vlaneseq
        %v1008 = vshrl.u32 %v1007, 7
        %v1009 = vsub.s32 %v1006, %v1008
        %v1010 = vrot.slane %v1002, %v1009
        %v1012 = vunpack.c.l.s4 1983009808
        %v1013 = vunpack.c.0.s8 %v1012
        %v1014 = vlaneseq
        %v1015 = vshrl.u32 %v1014, 7
        %v1016 = vsub.s32 %v1013, %v1015
        %v1017 = vrot.slane %v1003, %v1016
        %v1018 = vcombine.low %v994, %v1010
        %v1019 = vcombine.high %v994, %v1010
        %v1021 = vunpack.c.l.s4 1934713408
        %v1022 = vunpack.c.0.s8 %v1021
        %v1023 = vlaneseq
        %v1024 = vshrl.u32 %v1023, 7
        %v1025 = vsub.s32 %v1022, %v1024
        %v1026 = vrot.slane %v1018, %v1025
        %v1028 = vunpack.c.l.s4 1934713408
        %v1029 = vunpack.c.0.s8 %v1028
        %v1030 = vlaneseq
        %v1031 = vshrl.u32 %v1030, 7
        %v1032 = vsub.s32 %v1029, %v1031
        %v1033 = vrot.slane %v1019, %v1032
        %v1034 = vcombine.low %v1001, %v1017
        %v1035 = vcombine.high %v1001, %v1017
        %v1037 = vunpack.c.l.s4 1934713408
        %v1038 = vunpack.c.0.s8 %v1037
        %v1039 = vlaneseq
        %v1040 = vshrl.u32 %v1039, 7
        %v1041 = vsub.s32 %v1038, %v1040
        %v1042 = vrot.slane %v1034, %v1041
        %v1044 = vunpack.c.l.s4 1934713408
        %v1045 = vunpack.c.0.s8 %v1044
        %v1046 = vlaneseq
        %v1047 = vshrl.u32 %v1046, 7
        %v1048 = vsub.s32 %v1045, %v1047
        %v1049 = vrot.slane %v1035, %v1048
        %v1050 = vcombine.high %v1026, 0.0
        %v1051 = vcombine.high %v1033, 0.0
        %v1052 = vcombine.high %v1042, 0.0
        %v1053 = vcombine.high %v1049, 0.0
        %1054 = vst [vmem:[#allocation2 + $0xc0] sm:$0xf] %v1026
        %1055 = vst [vmem:[#allocation2 + $0xc8] sm:$0xf] %v1050
        %1056 = vst [vmem:[#allocation2 + $0xd0] sm:$0xf] %v1033
        %1057 = vst [vmem:[#allocation2 + $0xd8] sm:$0xf] %v1051
        %1058 = vst [vmem:[#allocation2 + $0xe0] sm:$0xf] %v1042
        %1059 = vst [vmem:[#allocation2 + $0xe8] sm:$0xf] %v1052
        %1060 = vst [vmem:[#allocation2 + $0xf0] sm:$0xf] %v1049
        %1061 = vst [vmem:[#allocation2 + $0xf8] sm:$0xf] %v1053
        %v1062 = vld [vmem:[%s1] sm:$0xff]
        %v1063 = vld [vmem:[#allocation2] sm:$0xff]
        %v1064 = vld [vmem:[#allocation2 + $0x8] sm:$0xff]
        %v1065 = vld [vmem:[#allocation2 + $0x10] sm:$0xff]
        %v1066 = vld [vmem:[#allocation2 + $0x18] sm:$0xff]
        %v1067 = vld [vmem:[#allocation2 + $0x20] sm:$0xff]
        %v1068 = vld [vmem:[#allocation2 + $0x28] sm:$0xff]
        %v1069 = vld [vmem:[#allocation2 + $0x30] sm:$0xff]
        %v1070 = vld [vmem:[#allocation2 + $0x38] sm:$0xff]
        %v1071 = vld [vmem:[#allocation2 + $0x40] sm:$0xff]
        %v1072 = vld [vmem:[#allocation2 + $0x48] sm:$0xff]
        %v1073 = vld [vmem:[#allocation2 + $0x50] sm:$0xff]
        %v1074 = vld [vmem:[#allocation2 + $0x58] sm:$0xff]
        %v1075 = vld [vmem:[#allocation2 + $0x60] sm:$0xff]
        %v1076 = vld [vmem:[#allocation2 + $0x68] sm:$0xff]
        %v1077 = vld [vmem:[#allocation2 + $0x70] sm:$0xff]
        %v1078 = vld [vmem:[#allocation2 + $0x78] sm:$0xff]
        %v1079 = vld [vmem:[#allocation2 + $0x80] sm:$0xff]
        %v1080 = vld [vmem:[#allocation2 + $0x88] sm:$0xff]
        %v1081 = vld [vmem:[#allocation2 + $0x90] sm:$0xff]
        %v1082 = vld [vmem:[#allocation2 + $0x98] sm:$0xff]
        %v1083 = vld [vmem:[#allocation2 + $0xa0] sm:$0xff]
        %v1084 = vld [vmem:[#allocation2 + $0xa8] sm:$0xff]
        %v1085 = vld [vmem:[#allocation2 + $0xb0] sm:$0xff]
        %v1086 = vld [vmem:[#allocation2 + $0xb8] sm:$0xff]
        %v1087 = vld [vmem:[#allocation2 + $0xc0] sm:$0xf]
        %v1088 = vld [vmem:[#allocation2 + $0xc8] sm:$0xf]
        %v1089 = vld [vmem:[#allocation2 + $0xd0] sm:$0xf]
        %v1090 = vld [vmem:[#allocation2 + $0xd8] sm:$0xf]
        %v1091 = vld [vmem:[#allocation2 + $0xe0] sm:$0xf]
        %v1092 = vld [vmem:[#allocation2 + $0xe8] sm:$0xf]
        %v1093 = vld [vmem:[#allocation2 + $0xf0] sm:$0xf]
        %v1094 = vld [vmem:[#allocation2 + $0xf8] sm:$0xf]
        %v1095 = vld [vmem:[%s2] sm:$0xff]
        %1097 = vset.pattern.permute.xlu0 0
        %1098 = vperm.xlu0 %1097, %v1095
        %v1099 = vpop.permute.xlu0 %1098
        %vm1101 = vcmask 228352
        %v1103 = vsel %vm1101, %v1062, 0
        %vm1105 = vcmask 1043456
        %v1107 = vsel %vm1105, %v1087, 0
        %v1110 = vsel %vm1105, %v1088, 0
        %v1113 = vsel %vm1105, %v1089, 0
        %v1116 = vsel %vm1105, %v1090, 0
        %v1119 = vsel %vm1105, %v1091, 0
        %v1122 = vsel %vm1105, %v1092, 0
        %v1125 = vsel %vm1105, %v1093, 0
        %v1128 = vsel %vm1105, %v1094, 0
        %1130 = vmatprep.subr.mxu0 0.0
        %1131 = vmatpush1.msra.mxu0 0.0
        %1132 = vmatprep.subr.mxu0 0.0
        %1133 = vmatpush1.msra.mxu0 0.0
        %1134 = vmatprep.subr.mxu0 0.0
        %1135 = vmatpush1.msra.mxu0 0.0
        %1136 = vmatprep.subr.mxu0 0.0
        %1137 = vmatpush1.msra.mxu0 0.0
        %1138 = vmatprep.subr.mxu0 0.0
        %1139 = vmatpush1.msra.mxu0 0.0
        %1140 = vmatprep.subr.mxu0 0.0
        %1141 = vmatpush1.msra.mxu0 0.0
        %1142 = vmatprep.subr.mxu0 0.0
        %1143 = vmatpush1.msra.mxu0 0.0
        %1144 = vmatprep.subr.mxu0 0.0
        %1145 = vmatpush1.msra.mxu0 0.0
        %1146 = vmatprep.subr.mxu0 0.0
        %1147 = vmatpush1.msra.mxu0 0.0
        %1148 = vmatprep.subr.mxu0 0.0
        %1149 = vmatpush1.msra.mxu0 0.0
        %1150 = vmatprep.subr.mxu0 0.0
        %1151 = vmatpush1.msra.mxu0 0.0
        %1152 = vmatprep.subr.mxu0 0.0
        %1153 = vmatpush1.msra.mxu0 0.0
        %1154 = vmatprep.subr.mxu0 %v1110
        %1155 = vmatpush1.msra.mxu0 %v1107
        %1156 = vmatprep.subr.mxu0 %v1080
        %1157 = vmatpush1.msra.mxu0 %v1079
        %1158 = vmatprep.subr.mxu0 %v1072
        %1159 = vmatpush1.msra.mxu0 %v1071
        %1160 = vmatprep.subr.mxu0 %v1064
        %1161 = vmatpush1.msra.mxu0 %v1063
        %1162 = vmatprep.subr.mxu0 0.0
        %1163 = vmatpush2.msra.mxu0 0.0
        %1164 = vmatprep.subr.mxu0 0.0
        %1165 = vmatpush2.msra.mxu0 0.0
        %1166 = vmatprep.subr.mxu0 0.0
        %1167 = vmatpush2.msra.mxu0 0.0
        %1168 = vmatprep.subr.mxu0 0.0
        %1169 = vmatpush2.msra.mxu0 0.0
        %1170 = vmatprep.subr.mxu0 0.0
        %1171 = vmatpush2.msra.mxu0 0.0
        %1172 = vmatprep.subr.mxu0 0.0
        %1173 = vmatpush2.msra.mxu0 0.0
        %1174 = vmatprep.subr.mxu0 0.0
        %1175 = vmatpush2.msra.mxu0 0.0
        %1176 = vmatprep.subr.mxu0 0.0
        %1177 = vmatpush2.msra.mxu0 0.0
        %1178 = vmatprep.subr.mxu0 0.0
        %1179 = vmatpush2.msra.mxu0 0.0
        %1180 = vmatprep.subr.mxu0 0.0
        %1181 = vmatpush2.msra.mxu0 0.0
        %1182 = vmatprep.subr.mxu0 0.0
        %1183 = vmatpush2.msra.mxu0 0.0
        %1184 = vmatprep.subr.mxu0 0.0
        %1185 = vmatpush2.msra.mxu0 0.0
        %1186 = vmatprep.subr.mxu0 0.0
        %1187 = vmatpush2.msra.mxu0 0.0
        %1188 = vmatprep.subr.mxu0 0.0
        %1189 = vmatpush2.msra.mxu0 0.0
        %1190 = vmatprep.subr.mxu0 0.0
        %1191 = vmatpush2.msra.mxu0 0.0
        %1192 = vmatprep.subr.mxu0 0.0
        %1193 = vmatpush2.msra.mxu0 0.0
        %1194 = vmatprep.mubr.f32.mxu0 0.0
        %1195 = vmatmul.mubr.f32.gmra.mxu0 %v1103
        %v1196 = vpop.f32.mrf.mxu0
        %v1197 = vadd.f32 %v1099, %v1196
        %v1198 = vpop.f32.mrf.mxu0
        %v1199 = vadd.f32 %v1099, %v1198
        %1200 = vdwg.mxu0
        %1201 = vmatprep.subr.mxu0 0.0
        %1202 = vmatpush1.msra.mxu0 0.0
        %1203 = vmatprep.subr.mxu0 0.0
        %1204 = vmatpush1.msra.mxu0 0.0
        %1205 = vmatprep.subr.mxu0 0.0
        %1206 = vmatpush1.msra.mxu0 0.0
        %1207 = vmatprep.subr.mxu0 0.0
        %1208 = vmatpush1.msra.mxu0 0.0
        %1209 = vmatprep.subr.mxu0 0.0
        %1210 = vmatpush1.msra.mxu0 0.0
        %1211 = vmatprep.subr.mxu0 0.0
        %1212 = vmatpush1.msra.mxu0 0.0
        %1213 = vmatprep.subr.mxu0 0.0
        %1214 = vmatpush1.msra.mxu0 0.0
        %1215 = vmatprep.subr.mxu0 0.0
        %1216 = vmatpush1.msra.mxu0 0.0
        %1217 = vmatprep.subr.mxu0 0.0
        %1218 = vmatpush1.msra.mxu0 0.0
        %1219 = vmatprep.subr.mxu0 0.0
        %1220 = vmatpush1.msra.mxu0 0.0
        %1221 = vmatprep.subr.mxu0 0.0
        %1222 = vmatpush1.msra.mxu0 0.0
        %1223 = vmatprep.subr.mxu0 0.0
        %1224 = vmatpush1.msra.mxu0 0.0
        %1225 = vmatprep.subr.mxu0 %v1116
        %1226 = vmatpush1.msra.mxu0 %v1113
        %1227 = vmatprep.subr.mxu0 %v1082
        %1228 = vmatpush1.msra.mxu0 %v1081
        %1229 = vmatprep.subr.mxu0 %v1074
        %1230 = vmatpush1.msra.mxu0 %v1073
        %1231 = vmatprep.subr.mxu0 %v1066
        %1232 = vmatpush1.msra.mxu0 %v1065
        %1233 = vmatprep.subr.mxu0 0.0
        %1234 = vmatpush2.msra.mxu0 0.0
        %1235 = vmatprep.subr.mxu0 0.0
        %1236 = vmatpush2.msra.mxu0 0.0
        %1237 = vmatprep.subr.mxu0 0.0
        %1238 = vmatpush2.msra.mxu0 0.0
        %1239 = vmatprep.subr.mxu0 0.0
        %1240 = vmatpush2.msra.mxu0 0.0
        %1241 = vmatprep.subr.mxu0 0.0
        %1242 = vmatpush2.msra.mxu0 0.0
        %1243 = vmatprep.subr.mxu0 0.0
        %1244 = vmatpush2.msra.mxu0 0.0
        %1245 = vmatprep.subr.mxu0 0.0
        %1246 = vmatpush2.msra.mxu0 0.0
        %1247 = vmatprep.subr.mxu0 0.0
        %1248 = vmatpush2.msra.mxu0 0.0
        %1249 = vmatprep.subr.mxu0 0.0
        %1250 = vmatpush2.msra.mxu0 0.0
        %1251 = vmatprep.subr.mxu0 0.0
        %1252 = vmatpush2.msra.mxu0 0.0
        %1253 = vmatprep.subr.mxu0 0.0
        %1254 = vmatpush2.msra.mxu0 0.0
        %1255 = vmatprep.subr.mxu0 0.0
        %1256 = vmatpush2.msra.mxu0 0.0
        %1257 = vmatprep.subr.mxu0 0.0
        %1258 = vmatpush2.msra.mxu0 0.0
        %1259 = vmatprep.subr.mxu0 0.0
        %1260 = vmatpush2.msra.mxu0 0.0
        %1261 = vmatprep.subr.mxu0 0.0
        %1262 = vmatpush2.msra.mxu0 0.0
        %1263 = vmatprep.subr.mxu0 0.0
        %1264 = vmatpush2.msra.mxu0 0.0
        %1265 = vmatprep.mubr.f32.mxu0 0.0
        %1266 = vmatmul.mubr.f32.gmra.mxu0 %v1103
        %v1267 = vpop.f32.mrf.mxu0
        %v1268 = vadd.f32 %v1099, %v1267
        %v1269 = vpop.f32.mrf.mxu0
        %v1270 = vadd.f32 %v1099, %v1269
        %1271 = vdwg.mxu0
        %1272 = vmatprep.subr.mxu0 0.0
        %1273 = vmatpush1.msra.mxu0 0.0
        %1274 = vmatprep.subr.mxu0 0.0
        %1275 = vmatpush1.msra.mxu0 0.0
        %1276 = vmatprep.subr.mxu0 0.0
        %1277 = vmatpush1.msra.mxu0 0.0
        %1278 = vmatprep.subr.mxu0 0.0
        %1279 = vmatpush1.msra.mxu0 0.0
        %1280 = vmatprep.subr.mxu0 0.0
        %1281 = vmatpush1.msra.mxu0 0.0
        %1282 = vmatprep.subr.mxu0 0.0
        %1283 = vmatpush1.msra.mxu0 0.0
        %1284 = vmatprep.subr.mxu0 0.0
        %1285 = vmatpush1.msra.mxu0 0.0
        %1286 = vmatprep.subr.mxu0 0.0
        %1287 = vmatpush1.msra.mxu0 0.0
        %1288 = vmatprep.subr.mxu0 0.0
        %1289 = vmatpush1.msra.mxu0 0.0
        %1290 = vmatprep.subr.mxu0 0.0
        %1291 = vmatpush1.msra.mxu0 0.0
        %1292 = vmatprep.subr.mxu0 0.0
        %1293 = vmatpush1.msra.mxu0 0.0
        %1294 = vmatprep.subr.mxu0 0.0
        %1295 = vmatpush1.msra.mxu0 0.0
        %1296 = vmatprep.subr.mxu0 %v1122
        %1297 = vmatpush1.msra.mxu0 %v1119
        %1298 = vmatprep.subr.mxu0 %v1084
        %1299 = vmatpush1.msra.mxu0 %v1083
        %1300 = vmatprep.subr.mxu0 %v1076
        %1301 = vmatpush1.msra.mxu0 %v1075
        %1302 = vmatprep.subr.mxu0 %v1068
        %1303 = vmatpush1.msra.mxu0 %v1067
        %1304 = vmatprep.subr.mxu0 0.0
        %1305 = vmatpush2.msra.mxu0 0.0
        %1306 = vmatprep.subr.mxu0 0.0
        %1307 = vmatpush2.msra.mxu0 0.0
        %1308 = vmatprep.subr.mxu0 0.0
        %1309 = vmatpush2.msra.mxu0 0.0
        %1310 = vmatprep.subr.mxu0 0.0
        %1311 = vmatpush2.msra.mxu0 0.0
        %1312 = vmatprep.subr.mxu0 0.0
        %1313 = vmatpush2.msra.mxu0 0.0
        %1314 = vmatprep.subr.mxu0 0.0
        %1315 = vmatpush2.msra.mxu0 0.0
        %1316 = vmatprep.subr.mxu0 0.0
        %1317 = vmatpush2.msra.mxu0 0.0
        %1318 = vmatprep.subr.mxu0 0.0
        %1319 = vmatpush2.msra.mxu0 0.0
        %1320 = vmatprep.subr.mxu0 0.0
        %1321 = vmatpush2.msra.mxu0 0.0
        %1322 = vmatprep.subr.mxu0 0.0
        %1323 = vmatpush2.msra.mxu0 0.0
        %1324 = vmatprep.subr.mxu0 0.0
        %1325 = vmatpush2.msra.mxu0 0.0
        %1326 = vmatprep.subr.mxu0 0.0
        %1327 = vmatpush2.msra.mxu0 0.0
        %1328 = vmatprep.subr.mxu0 0.0
        %1329 = vmatpush2.msra.mxu0 0.0
        %1330 = vmatprep.subr.mxu0 0.0
        %1331 = vmatpush2.msra.mxu0 0.0
        %1332 = vmatprep.subr.mxu0 0.0
        %1333 = vmatpush2.msra.mxu0 0.0
        %1334 = vmatprep.subr.mxu0 0.0
        %1335 = vmatpush2.msra.mxu0 0.0
        %1336 = vmatprep.mubr.f32.mxu0 0.0
        %1337 = vmatmul.mubr.f32.gmra.mxu0 %v1103
        %v1338 = vpop.f32.mrf.mxu0
        %v1339 = vadd.f32 %v1099, %v1338
        %v1340 = vpop.f32.mrf.mxu0
        %v1341 = vadd.f32 %v1099, %v1340
        %1342 = vdwg.mxu0
        %1343 = vmatprep.subr.mxu0 0.0
        %1344 = vmatpush1.msra.mxu0 0.0
        %1345 = vmatprep.subr.mxu0 0.0
        %1346 = vmatpush1.msra.mxu0 0.0
        %1347 = vmatprep.subr.mxu0 0.0
        %1348 = vmatpush1.msra.mxu0 0.0
        %1349 = vmatprep.subr.mxu0 0.0
        %1350 = vmatpush1.msra.mxu0 0.0
        %1351 = vmatprep.subr.mxu0 0.0
        %1352 = vmatpush1.msra.mxu0 0.0
        %1353 = vmatprep.subr.mxu0 0.0
        %1354 = vmatpush1.msra.mxu0 0.0
        %1355 = vmatprep.subr.mxu0 0.0
        %1356 = vmatpush1.msra.mxu0 0.0
        %1357 = vmatprep.subr.mxu0 0.0
        %1358 = vmatpush1.msra.mxu0 0.0
        %1359 = vmatprep.subr.mxu0 0.0
        %1360 = vmatpush1.msra.mxu0 0.0
        %1361 = vmatprep.subr.mxu0 0.0
        %1362 = vmatpush1.msra.mxu0 0.0
        %1363 = vmatprep.subr.mxu0 0.0
        %1364 = vmatpush1.msra.mxu0 0.0
        %1365 = vmatprep.subr.mxu0 0.0
        %1366 = vmatpush1.msra.mxu0 0.0
        %1367 = vmatprep.subr.mxu0 %v1128
        %1368 = vmatpush1.msra.mxu0 %v1125
        %1369 = vmatprep.subr.mxu0 %v1086
        %1370 = vmatpush1.msra.mxu0 %v1085
        %1371 = vmatprep.subr.mxu0 %v1078
        %1372 = vmatpush1.msra.mxu0 %v1077
        %1373 = vmatprep.subr.mxu0 %v1070
        %1374 = vmatpush1.msra.mxu0 %v1069
        %1375 = vmatprep.subr.mxu0 0.0
        %1376 = vmatpush2.msra.mxu0 0.0
        %1377 = vmatprep.subr.mxu0 0.0
        %1378 = vmatpush2.msra.mxu0 0.0
        %1379 = vmatprep.subr.mxu0 0.0
        %1380 = vmatpush2.msra.mxu0 0.0
        %1381 = vmatprep.subr.mxu0 0.0
        %1382 = vmatpush2.msra.mxu0 0.0
        %1383 = vmatprep.subr.mxu0 0.0
        %1384 = vmatpush2.msra.mxu0 0.0
        %1385 = vmatprep.subr.mxu0 0.0
        %1386 = vmatpush2.msra.mxu0 0.0
        %1387 = vmatprep.subr.mxu0 0.0
        %1388 = vmatpush2.msra.mxu0 0.0
        %1389 = vmatprep.subr.mxu0 0.0
        %1390 = vmatpush2.msra.mxu0 0.0
        %1391 = vmatprep.subr.mxu0 0.0
        %1392 = vmatpush2.msra.mxu0 0.0
        %1393 = vmatprep.subr.mxu0 0.0
        %1394 = vmatpush2.msra.mxu0 0.0
        %1395 = vmatprep.subr.mxu0 0.0
        %1396 = vmatpush2.msra.mxu0 0.0
        %1397 = vmatprep.subr.mxu0 0.0
        %1398 = vmatpush2.msra.mxu0 0.0
        %1399 = vmatprep.subr.mxu0 0.0
        %1400 = vmatpush2.msra.mxu0 0.0
        %1401 = vmatprep.subr.mxu0 0.0
        %1402 = vmatpush2.msra.mxu0 0.0
        %1403 = vmatprep.subr.mxu0 0.0
        %1404 = vmatpush2.msra.mxu0 0.0
        %1405 = vmatprep.subr.mxu0 0.0
        %1406 = vmatpush2.msra.mxu0 0.0
        %1407 = vmatprep.mubr.f32.mxu0 0.0
        %1408 = vmatmul.mubr.f32.gmra.mxu0 %v1103
        %v1409 = vpop.f32.mrf.mxu0
        %v1410 = vadd.f32 %v1099, %v1409
        %v1411 = vpop.f32.mrf.mxu0
        %v1412 = vadd.f32 %v1099, %v1411
        %1413 = vdwg.mxu0
        %1414 = vst [vmem:[%s206] sm:$0xff] %v1197
        %1415 = vst [vmem:[%s206 + $0x8] sm:$0xff] %v1199
        %1416 = vst [vmem:[%s206 + $0x10] sm:$0xff] %v1268
        %1417 = vst [vmem:[%s206 + $0x18] sm:$0xff] %v1270
        %1418 = vst [vmem:[%s206 + $0x20] sm:$0xff] %v1339
        %1419 = vst [vmem:[%s206 + $0x28] sm:$0xff] %v1341
        %1420 = vst [vmem:[%s206 + $0x30] sm:$0xff] %v1410
        %1421 = vst [vmem:[%s206 + $0x38] sm:$0xff] %v1412
        %s1422 = sand.u32 %s112, 1
        %s1423 = scalar_lea.sflag [#allocation5], %s1422
        %s1424 = sand.u32 %s112, 1
        %s1425 = smul.addr %s1424, 64
        %s1426 = scalar_lea.vmem [#allocation6], %s1425
        // Predicated region
        $region37: #{tpu_custom_call.1} parent=31 // pred_check
          %p1427 = pneg %p122
        $region38: #{tpu_custom_call.1} parent=31 // pred_check_branch
          %1429 = sbr.rel (%p1427) target = $region40
        $region39: #{tpu_custom_call.1} parent=31 // pred_region
          %s1430 = smul.u32 8, %s25
          %s1432 = ssub.s32 1024, 1024
          %1433 = vsyncadd %s1423, %s1432
          %s1434 = smul.addr %s24, 8
          %s1435 = sadd.s32 %s1430, %s1434
          %s1436 = smul.addr %s1435, 128
          %s1437 = scalar_lea.hbm %s3, %s1436
          %s1439 = sshll.u32 %s1426, 4
          %s1440 = int_to_ptr.vmem [resolvable:$true] %s1439
          %1442 = dma.vmem_to_hbm [thread:$0]  %s1440, 1024, %s1437, %s1423
        $region40: #{tpu_custom_call.1} parent=31 // pred_fallthru
          _
      $region32: #{tpu_custom_call.1} parent=5 // pred_fallthru
        _
      %p1443 = scmp.le.s32.totalorder 2, %s15
      // Predicated region
      $region41: #{tpu_custom_call.1} parent=5 // pred_check
        %p1444 = pneg %p1443
      $region42: #{tpu_custom_call.1} parent=5 // pred_check_branch
        %1446 = sbr.rel (%p1444) target = $region44
      $region43: #{tpu_custom_call.1} parent=5 // pred_region
        %s1447 = ssub.s32 %s15, 2
        // Predicated region
        $region45: #{tpu_custom_call.1} parent=43 // pred_check
          %p1448 = pneg %p128
        $region46: #{tpu_custom_call.1} parent=43 // pred_check_branch
          %1450 = sbr.rel (%p1448) target = $region48
        $region47: #{tpu_custom_call.1} parent=43 // pred_region
          %s1451 = sand.u32 %s113, 1
          %s1452 = scalar_lea.sflag [#allocation5], %s1451
          %s1453 = sand.u32 %s113, 1
          %s1454 = smul.addr %s1453, 64
          %s1455 = scalar_lea.vmem [#allocation6], %s1454
          %1456 = dma.done %s1452, 1024
        $region48: #{tpu_custom_call.1} parent=43 // pred_fallthru
          _
      $region44: #{tpu_custom_call.1} parent=5 // pred_fallthru
        _
    $region6: #{tpu_custom_call.1} parent=1 // loop_footer
      %s19 = sadd.s32 1, %s15
    $region7: #{tpu_custom_call.1} parent=1 // loop_footer_branch
      %14 = sbr.rel target = $region3
    $region8: #{tpu_custom_call.1} parent=1 // loop_exit
      _
    %1457 = vsyncpa [#allocation4], 1
    %s1458 = scalar_lea.sflag [#allocation4], 1
    %1459 = vsyncpa %s1458, 1
    %1460 = vsyncpa [#allocation5], 1
    %s1461 = scalar_lea.sflag [#allocation5], 1
    %1462 = vsyncpa %s1461, 1

</llo_original>
